<compile_context>
chip_gen: v7x
topology: tpu7x:2x2x1
jax: 0.10.0
libtpu: 0.0.40
codegen_flags: <defaults>
</compile_context>

<pallas_src>
import functools

import jax
import jax.numpy as jnp
from jax import lax
from jax.experimental import pallas as pl
from jax.experimental.pallas import tpu as pltpu


def final_block_kernel(slab_ref, cw_ref, bnb_ref, fcw_ref, fcb_ref, o_ref,
                       *, Nb, HW):
    """One grid step == one batch chunk of Nb images.

    slab_ref : (1, Nb*HW, K_pad)  im2col slab (lane-dense, MXU dtype)
    cw_ref   : (K_pad, Cp)        depthwise * pointwise * BN-scale folded weight
    bnb_ref  : (1, Cp)            BN bias (f32; padded channels = 0)
    fcw_ref  : (Cp, out_p)        fc weight * 1/(H*W)  (classes padded to 128)
    fcb_ref  : (1, out_p)         fc bias (padded classes = -1e30)
    o_ref    : (1, Nb, out_p)     log-softmax output block
    """
    cp = cw_ref.shape[-1]

    # separable conv (+ folded BN scale) as a single MXU matmul, f32 accumulation
    y = jnp.dot(slab_ref[0], cw_ref[...], preferred_element_type=jnp.float32)

    # BN bias + ReLU (VPU, f32)
    y = jnp.maximum(y + bnb_ref[...], 0.0)

    # global spatial sum pool (the 1/(H*W) factor is folded into fcw_ref).
    # NB: keep HW a multiple of 8 so this reshape is a pure sublane split.
    pooled = jnp.sum(y.reshape(Nb, HW, cp), axis=1)            # (Nb, Cp) f32

    # (Dropout == identity in eval mode) fully connected, f32 accumulation
    logits = jnp.dot(pooled.astype(fcw_ref.dtype), fcw_ref[...],
                     preferred_element_type=jnp.float32) + fcb_ref[...]

    # log-softmax (padded classes carry bias -1e30 -> exp underflows to 0;
    # this relies on the bias add + softmax staying f32)
    m = jnp.max(logits, axis=-1, keepdims=True)
    lse = jnp.log(jnp.sum(jnp.exp(logits - m), axis=-1, keepdims=True)) + m
    o_ref[0] = (logits - lse).astype(o_ref.dtype)


def _round_up(x, m):
    return ((x + m - 1) // m) * m


def _pick_batch_block(N, HW, k_pad, itemsize, budget_bytes):
    """Largest divisor Nb of N whose double-buffered input block fits the budget
    while keeping grid = N // Nb >= 2 whenever N >= 2 (pipelining on all
    generations + 2-TensorCore split on v7x).  For large N this also yields a
    big Mb = Nb*HW (MXU row fill); for tiny test batches it degrades gracefully.
    """
    fallback = 1
    for nb in range(N, 0, -1):
        if N % nb:
            continue
        if 2 * nb * HW * k_pad * itemsize > budget_bytes:   # double-buffered
            continue
        if fallback == 1:
            fallback = nb
        if N // nb >= 2:
            return nb
    return fallback


def final_block_forward(x_nchw, dw_w_oihw, pw_w_oihw, gamma, beta,
                        running_mean, running_var, fc_w_torch, fc_b,
                        *, eps=1e-5, mxu_dtype=jnp.float32, batch_block=None):
    """x_nchw: (N, C_in, H, W) float32; weights in PyTorch-native layouts."""
    N, C_in, H, W = x_nchw.shape
    KH, KW = dw_w_oihw.shape[2], dw_w_oihw.shape[3]
    C_out = pw_w_oihw.shape[0]
    out_size = fc_w_torch.shape[0]
    HW = H * W

    # lane-dense paddings: every MXU / store lane axis is a multiple of 128
    K = KH * KW * C_in
    k_pad = _round_up(K, 128)
    c_pad = _round_up(C_out, 128)
    out_p = _round_up(out_size, 128)

    itemsize = jnp.dtype(mxu_dtype).itemsize

    # Batch chunking.  ~48 MiB input budget is v7x-safe (64 MiB physical VMEM);
    # v5e/v6e simply get more pipelined steps with the same Nb.
    if batch_block is None:
        Nb = _pick_batch_block(N, HW, k_pad, itemsize, budget_bytes=48 << 20)
    else:
        Nb = batch_block
    assert N % Nb == 0, "batch_block must divide N"
    G = N // Nb
    Mb = Nb * HW

    # ---- im2col in the wrapper: lane-dense (G, Mb, k_pad) slab --------------
    x_nhwc = jnp.transpose(x_nchw, (0, 2, 3, 1))
    x_halo = jnp.pad(x_nhwc,
                     ((0, 0), (KH // 2, KH // 2), (KW // 2, KW // 2), (0, 0)))
    patches = [x_halo[:, kh:kh + H, kw:kw + W, :]
               for kh in range(KH) for kw in range(KW)]
    slab = jnp.concatenate(patches, axis=-1).reshape(N * HW, K)
    slab = jnp.pad(slab, ((0, 0), (0, k_pad - K)))
    # bf16 path: cast here so the HBM->VMEM DMA is already half-width
    slab = slab.astype(mxu_dtype).reshape(G, Mb, k_pad)

    # ---- fold depthwise * pointwise * BN-scale into one conv weight ---------
    bn_scale = gamma / jnp.sqrt(running_var + eps)
    bn_bias = beta - running_mean * bn_scale
    dw = jnp.transpose(dw_w_oihw[:, 0], (1, 2, 0))               # (KH, KW, C_in)
    pw = jnp.transpose(pw_w_oihw[:, :, 0, 0], (1, 0))            # (C_in, C_out)
    comb = (dw[..., None] * pw[None, None]).reshape(K, C_out) * bn_scale[None, :]
    comb_w = jnp.zeros((k_pad, c_pad), jnp.float32).at[:K, :C_out].set(comb)
    comb_w = comb_w.astype(mxu_dtype)
    bnb = jnp.zeros((1, c_pad), jnp.float32).at[0, :C_out].set(bn_bias)

    # ---- fold 1/(H*W) pooling factor into the FC weight, lane-pad classes ---
    fc_w = jnp.zeros((c_pad, out_p), jnp.float32)
    fc_w = fc_w.at[:C_out, :out_size].set(fc_w_torch.T * (1.0 / float(HW)))
    fc_w = fc_w.astype(mxu_dtype)
    fc_b_p = jnp.full((1, out_p), -1e30, jnp.float32).at[0, :out_size].set(fc_b)

    # ---- explicit VMEM budget (double-buffered input + weights + output) ----
    vmem_bytes = (2 * Mb * k_pad * itemsize                        # input block x2
                  + 2 * (k_pad * c_pad + c_pad * out_p) * itemsize  # weights x2
                  + 2 * (c_pad + out_p) * 4                         # biases x2
                  + 2 * Nb * out_p * 4                              # output x2
                  + (4 << 20))                                      # headroom
    vmem_limit = int(min(max(vmem_bytes, 16 << 20), 96 << 20))

    kernel = functools.partial(final_block_kernel, Nb=Nb, HW=HW)

    out3 = pl.pallas_call(
        kernel,
        out_shape=jax.ShapeDtypeStruct((G, Nb, out_p), jnp.float32),
        grid_spec=pltpu.PrefetchScalarGridSpec(
            num_scalar_prefetch=0,
            grid=(G,),
            in_specs=[
                pl.BlockSpec((1, Mb, k_pad), lambda b: (b, 0, 0)),
                pl.BlockSpec((k_pad, c_pad), lambda b: (0, 0)),
                pl.BlockSpec((1, c_pad), lambda b: (0, 0)),
                pl.BlockSpec((c_pad, out_p), lambda b: (0, 0)),
                pl.BlockSpec((1, out_p), lambda b: (0, 0)),
            ],
            out_specs=pl.BlockSpec((1, Nb, out_p), lambda b: (b, 0, 0)),
        ),
        compiler_params=pltpu.CompilerParams(
            dimension_semantics=("parallel",),
            vmem_limit_bytes=vmem_limit),
    )(slab, comb_w, bnb, fc_w, fc_b_p)

    return out3.reshape(N, out_p)[:, :out_size]


def reference_forward(x_nchw, dw_w_oihw, pw_w_oihw, bn_scale, bn_bias,
                      fc_w_torch, fc_b):
    """Pure-JAX reference using lax.conv (NCHW / OIHW, matches PyTorch)."""
    C_in = x_nchw.shape[1]
    dw = lax.conv_general_dilated(
        x_nchw, dw_w_oihw, window_strides=(1, 1), padding=((1, 1), (1, 1)),
        dimension_numbers=("NCHW", "OIHW", "NCHW"), feature_group_count=C_in)
    pw = lax.conv_general_dilated(
        dw, pw_w_oihw, window_strides=(1, 1), padding="VALID",
        dimension_numbers=("NCHW", "OIHW", "NCHW"))
    y = jnp.maximum(pw * bn_scale[None, :, None, None]
                    + bn_bias[None, :, None, None], 0.0)
    pooled = jnp.mean(y, axis=(-1, -2))                       # (N, C_out)
    logits = pooled @ fc_w_torch.T + fc_b
    return jax.nn.log_softmax(logits, axis=1)


if __name__ == "__main__":
    # Small shapes consistent with the module structure.
    N, C_in, H, W = 2, 8, 8, 8
    C_out, out_size = 32, 16
    KH, KW = 3, 3

    key = jax.random.PRNGKey(0)
    ks = jax.random.split(key, 8)

    x = jax.random.normal(ks[0], (N, C_in, H, W), dtype=jnp.float32)

    # Deterministic parameter init (PyTorch-native shapes).
    dw_w_oihw = 0.2 * jax.random.normal(ks[1], (C_in, 1, KH, KW), jnp.float32)
    pw_w_oihw = 0.2 * jax.random.normal(ks[2], (C_out, C_in, 1, 1), jnp.float32)
    gamma = 1.0 + 0.1 * jax.random.normal(ks[3], (C_out,), jnp.float32)
    beta = 0.1 * jax.random.normal(ks[4], (C_out,), jnp.float32)
    running_mean = 0.1 * jax.random.normal(ks[5], (C_out,), jnp.float32)
    running_var = 1.0 + 0.5 * jnp.abs(jax.random.normal(ks[6], (C_out,), jnp.float32))
    fc_w_torch = 0.2 * jax.random.normal(ks[7], (out_size, C_out), jnp.float32)
    fc_b = jnp.linspace(-0.1, 0.1, out_size, dtype=jnp.float32)

    eps = 1e-5
    bn_scale = gamma / jnp.sqrt(running_var + eps)
    bn_bias = beta - running_mean * bn_scale
    ref = reference_forward(x, dw_w_oihw, pw_w_oihw, bn_scale, bn_bias,
                            fc_w_torch, fc_b)

    # f32 MXU path (all generations; tight tolerance against the f32 reference)
    fwd_f32 = jax.jit(functools.partial(final_block_forward, eps=eps,
                                        mxu_dtype=jnp.float32))
    out = jax.block_until_ready(
        fwd_f32(x, dw_w_oihw, pw_w_oihw, gamma, beta,
                running_mean, running_var, fc_w_torch, fc_b))
    assert out.shape == (N, out_size)
    assert jnp.allclose(out, ref, atol=1e-4, rtol=1e-4), (
        f"f32 max abs err {jnp.max(jnp.abs(out - ref))}")

    # v6e/v7x tuning path: bf16 slab + weights, f32 accumulation + f32 elementwise.
    fwd_bf16 = jax.jit(functools.partial(final_block_forward, eps=eps,
                                         mxu_dtype=jnp.bfloat16))
    out_bf16 = jax.block_until_ready(
        fwd_bf16(x, dw_w_oihw, pw_w_oihw, gamma, beta,
                 running_mean, running_var, fc_w_torch, fc_b))
    assert jnp.allclose(out_bf16, ref, atol=5e-2, rtol=5e-2), (
        f"bf16 max abs err {jnp.max(jnp.abs(out_bf16 - ref))}")

    print("KERNEL_OK")
</pallas_src>

<mosaic_0001>
module attributes {stable_mosaic.version = 11 : i64} {
  func.func @final_block_kernel(%arg0: i32, %arg1: memref<1x64x128xf32, #tpu.memory_space<vmem>>, %arg2: memref<128x128xf32, #tpu.memory_space<vmem>>, %arg3: memref<1x128xf32, #tpu.memory_space<vmem>>, %arg4: memref<128x128xf32, #tpu.memory_space<vmem>>, %arg5: memref<1x128xf32, #tpu.memory_space<vmem>>, %arg6: memref<1x1x128xf32, #tpu.memory_space<vmem>>) attributes {dimension_semantics = [#tpu.dimension_semantics<parallel>], iteration_bounds = array<i64: 2>, scalar_prefetch = 0 : i64, scratch_operands = 0 : i64, tpu.core_type = #tpu.core_type<tc>, window_params = [{transform_indices = @transform_0, window_bounds = array<i64: 1, 64, 128>}, {pipeline_mode = #tpu.pipeline_mode<synchronous>, transform_indices = @transform_1, window_bounds = array<i64: 128, 128>}, {pipeline_mode = #tpu.pipeline_mode<synchronous>, transform_indices = @transform_2, window_bounds = array<i64: 1, 128>}, {pipeline_mode = #tpu.pipeline_mode<synchronous>, transform_indices = @transform_3, window_bounds = array<i64: 128, 128>}, {pipeline_mode = #tpu.pipeline_mode<synchronous>, transform_indices = @transform_4, window_bounds = array<i64: 1, 128>}, {transform_indices = @transform_5, window_bounds = array<i64: 1, 1, 128>}]} {
    %c0 = arith.constant 0 : index
    %c0_0 = arith.constant 0 : index
    %c0_1 = arith.constant 0 : index
    %0 = vector.load %arg1[%c0, %c0_0, %c0_1] : memref<1x64x128xf32, #tpu.memory_space<vmem>>, vector<1x64x128xf32>
    %1 = vector.shape_cast %0 : vector<1x64x128xf32> to vector<64x128xf32>
    %c0_2 = arith.constant 0 : index
    %c0_3 = arith.constant 0 : index
    %2 = vector.load %arg2[%c0_2, %c0_3] : memref<128x128xf32, #tpu.memory_space<vmem>>, vector<128x128xf32>
    %cst = arith.constant dense<0.000000e+00> : vector<64x128xf32>
    %3 = tpu.matmul %1, %2, %cst {dimension_numbers = #tpu.dot_dimension_numbers<[1], [0], [0], [1], [0, 0, 1, 1], [], []>} : vector<64x128xf32>, vector<128x128xf32>, vector<64x128xf32> -> vector<64x128xf32>
    %c0_4 = arith.constant 0 : index
    %c0_5 = arith.constant 0 : index
    %4 = vector.load %arg3[%c0_4, %c0_5] : memref<1x128xf32, #tpu.memory_space<vmem>>, vector<1x128xf32>
    %5 = vector.broadcast %4 : vector<1x128xf32> to vector<64x128xf32>
    %6 = arith.addf %3, %5 : vector<64x128xf32>
    %cst_6 = arith.constant 0.000000e+00 : f32
    %7 = vector.broadcast %cst_6 : f32 to vector<64x128xf32>
    %8 = arith.maximumf %6, %7 : vector<64x128xf32>
    %9 = vector.shape_cast %8 : vector<64x128xf32> to vector<1x64x128xf32>
    %cst_7 = arith.constant dense<0.000000e+00> : vector<1x128xf32>
    %10 = vector.multi_reduction <add>, %9, %cst_7 [1] : vector<1x64x128xf32> to vector<1x128xf32>
    %c0_8 = arith.constant 0 : index
    %c0_9 = arith.constant 0 : index
    %11 = vector.load %arg4[%c0_8, %c0_9] : memref<128x128xf32, #tpu.memory_space<vmem>>, vector<128x128xf32>
    %cst_10 = arith.constant dense<0.000000e+00> : vector<1x128xf32>
    %12 = tpu.matmul %10, %11, %cst_10 {dimension_numbers = #tpu.dot_dimension_numbers<[1], [0], [0], [1], [0, 0, 1, 1], [], []>} : vector<1x128xf32>, vector<128x128xf32>, vector<1x128xf32> -> vector<1x128xf32>
    %c0_11 = arith.constant 0 : index
    %c0_12 = arith.constant 0 : index
    %13 = vector.load %arg5[%c0_11, %c0_12] : memref<1x128xf32, #tpu.memory_space<vmem>>, vector<1x128xf32>
    %14 = arith.addf %12, %13 : vector<1x128xf32>
    %cst_13 = arith.constant dense<0xFF800000> : vector<1xf32>
    %15 = vector.multi_reduction <maximumf>, %14, %cst_13 [1] : vector<1x128xf32> to vector<1xf32>
    %16 = vector.shape_cast %15 : vector<1xf32> to vector<1x1xf32>
    %17 = vector.broadcast %16 : vector<1x1xf32> to vector<1x128xf32>
    %18 = arith.subf %14, %17 : vector<1x128xf32>
    %19 = math.exp %18 : vector<1x128xf32>
    %cst_14 = arith.constant dense<0.000000e+00> : vector<1xf32>
    %20 = vector.multi_reduction <add>, %19, %cst_14 [1] : vector<1x128xf32> to vector<1xf32>
    %21 = vector.shape_cast %20 : vector<1xf32> to vector<1x1xf32>
    %22 = math.log %21 : vector<1x1xf32>
    %23 = arith.addf %22, %16 : vector<1x1xf32>
    %24 = vector.broadcast %23 : vector<1x1xf32> to vector<1x128xf32>
    %25 = arith.subf %14, %24 : vector<1x128xf32>
    %c0_15 = arith.constant 0 : index
    %c0_16 = arith.constant 0 : index
    %c0_17 = arith.constant 0 : index
    %26 = vector.load %arg6[%c0_15, %c0_16, %c0_17] : memref<1x1x128xf32, #tpu.memory_space<vmem>>, vector<1x1x128xf32>
    %27 = vector.shape_cast %26 : vector<1x1x128xf32> to vector<1x128xf32>
    %28 = vector.shape_cast %25 : vector<1x128xf32> to vector<1x1x128xf32>
    tpu.vector_store %arg6[%c0_15, %c0_16, %c0_17], %28 {strides = array<i32>} : memref<1x1x128xf32, #tpu.memory_space<vmem>>, vector<1x1x128xf32>,
    return
  }
  func.func @transform_0(%arg0: i32) -> (i32, i32, i32) {
    %c0_i32 = arith.constant 0 : i32
    %c0_i32_0 = arith.constant 0 : i32
    %c0_i32_1 = arith.constant 0 : i32
    return %arg0, %c0_i32, %c0_i32_0 : i32, i32, i32
  }
  func.func @transform_1(%arg0: i32) -> (i32, i32) {
    %c0_i32 = arith.constant 0 : i32
    %c0_i32_0 = arith.constant 0 : i32
    %c0_i32_1 = arith.constant 0 : i32
    return %c0_i32, %c0_i32_0 : i32, i32
  }
  func.func @transform_2(%arg0: i32) -> (i32, i32) {
    %c0_i32 = arith.constant 0 : i32
    %c0_i32_0 = arith.constant 0 : i32
    %c0_i32_1 = arith.constant 0 : i32
    return %c0_i32, %c0_i32_0 : i32, i32
  }
  func.func @transform_3(%arg0: i32) -> (i32, i32) {
    %c0_i32 = arith.constant 0 : i32
    %c0_i32_0 = arith.constant 0 : i32
    %c0_i32_1 = arith.constant 0 : i32
    return %c0_i32, %c0_i32_0 : i32, i32
  }
  func.func @transform_4(%arg0: i32) -> (i32, i32) {
    %c0_i32 = arith.constant 0 : i32
    %c0_i32_0 = arith.constant 0 : i32
    %c0_i32_1 = arith.constant 0 : i32
    return %c0_i32, %c0_i32_0 : i32, i32
  }
  func.func @transform_5(%arg0: i32) -> (i32, i32, i32) {
    %c0_i32 = arith.constant 0 : i32
    %c0_i32_0 = arith.constant 0 : i32
    %c0_i32_1 = arith.constant 0 : i32
    return %arg0, %c0_i32, %c0_i32_0 : i32, i32, i32
  }
}

</mosaic_0001>

<llo_original>
// kernel: final_block_forward.1
$region0: #{final_block_forward.1}
  #allocation0 [shape = 'u32[]', space=smem, size = 0x4, offset = 0x4, fixed_abs, tag = 'smem constant byte address 0x4 - core index']
  #allocation1 [shape = 'u32[144,128]{1,0:T(1,128)}', space=vmem, size = 0x12000, scoped, tag = 'internal scratch']
  %s0 = inlined_call_operand.vmem [shape: f32[2,64,128], index: 0, kind: input, shape index: {}]
  %s1 = inlined_call_operand.vmem [shape: f32[128,128], index: 1, kind: input, shape index: {}]
  %s2 = inlined_call_operand.vmem [shape: f32[1,128], index: 2, kind: input, shape index: {}]
  %s3 = inlined_call_operand.vmem [shape: f32[128,128], index: 3, kind: input, shape index: {}]
  %s4 = inlined_call_operand.vmem [shape: f32[1,128], index: 4, kind: input, shape index: {}]
  %s5 = inlined_call_operand.hbm [shape: f32[2,1,128], index: 5, kind: output, shape index: {}]
  %s6 = sld [smem:[#allocation0]]
  $region53: #{final_block_forward.1} parent=0
    _
  %s8 = ssub.s32 1, %s6
  %s9 = scalar_select 0, %s8, %s6
  $region1: #{final_block_forward.1} parent=0
    #allocation2 [shape = 'u8[1024]{0}', space=vmem, size = 0x400, scoped, tag = 'output window, operand 0']
    #allocation3 [shape = 's32[2]{0}', space=sflag, size = 0x8, scoped, tag = 'scoped memory for final_block_forward.1']
    %10 = vsyncpa [#allocation3], 0
    %s11 = scalar_lea.sflag [#allocation3], 1
    %12 = vsyncpa %s11, 0
    loop: start=0, step=1, limit=4
    $region2: #{final_block_forward.1} parent=1 // loop_pre_header
      _
    $region3: #{final_block_forward.1} parent=1 // loop_header
      %s14 = sphi 0, %s18
      %p15 = scmp.ge.s32.totalorder %s14, 4
      %s24 = sphi 0, %s26
      %s27 = sphi 0, %s24
      %s28 = sphi 0, %s27
      %s44 = sphi 0, %s28
      %s48 = sphi 0, %s48
      %s50 = sphi 0, %s48
      %s51 = sphi 0, %s50
      %s65 = sphi 0, %s51
      %s69 = sphi 0, %s69
      %s71 = sphi 0, %s69
      %s72 = sphi 0, %s71
      %s86 = sphi 0, %s72
      %s90 = sphi 0, %s90
      %s92 = sphi 0, %s90
      %s93 = sphi 0, %s92
      %s107 = sphi 0, %s93
      %s111 = sphi 0, %s111
      %s113 = sphi 0, %s111
      %s114 = sphi 0, %s113
      %s128 = sphi 0, %s114
      %s134 = sphi 0, %s136
      %s137 = sphi 0, %s134
      %s138 = sphi 0, %s137
      %s154 = sphi 0, %s138
    $region4: #{final_block_forward.1} parent=1 // loop_header_branch
      %17 = sbr.rel (%p15) target = $region8
    $region5: #{final_block_forward.1} parent=1 // loop_body
      %s19 = ssub.s32 %s14, 1
      %s20 = ssub.s32 %s14, 2
      %s21 = sadd.s32 %s14, 1
      %s22 = ssub.s32 %s14, %s21
      %p23 = scmp.eq.s32.totalorder %s22, 0
      %s25 = sadd.s32 %s24, 1
      %s26 = scalar_select %p23, %s24, %s25
      %p29 = pneg %p23
      %p30 = scmp.eq.s32.totalorder %s14, 1
      %p31 = por %p29, %p30
      %p32 = scmp.ne.s32.totalorder %s24, %s27
      %p33 = scmp.eq.s32.totalorder %s14, 0
      %p34 = por %p32, %p33
      %p35 = scmp.ne.s32.totalorder %s24, %s27
      %p36 = scmp.eq.s32.totalorder %s19, 1
      %p37 = por %p35, %p36
      %p38 = scmp.ne.s32.totalorder %s27, %s28
      %p39 = scmp.eq.s32.totalorder %s19, 0
      %p40 = por %p38, %p39
      %p41 = scmp.ne.s32.totalorder %s27, %s28
      %p42 = scmp.eq.s32.totalorder %s20, 1
      %p43 = por %p41, %p42
      %p45 = scmp.ne.s32.totalorder %s28, %s44
      %p46 = scmp.eq.s32.totalorder %s20, 0
      %p47 = por %p45, %p46
      %s49 = sadd.s32 %s48, 1
      %p52 = scmp.eq.s32.totalorder %s14, 1
      %p53 = scmp.ne.s32.totalorder %s48, %s50
      %p54 = scmp.eq.s32.totalorder %s14, 0
      %p55 = por %p53, %p54
      %p56 = scmp.ne.s32.totalorder %s48, %s50
      %p57 = scmp.eq.s32.totalorder %s19, 1
      %p58 = por %p56, %p57
      %p59 = scmp.ne.s32.totalorder %s50, %s51
      %p60 = scmp.eq.s32.totalorder %s19, 0
      %p61 = por %p59, %p60
      %p62 = scmp.ne.s32.totalorder %s50, %s51
      %p63 = scmp.eq.s32.totalorder %s20, 1
      %p64 = por %p62, %p63
      %p66 = scmp.ne.s32.totalorder %s51, %s65
      %p67 = scmp.eq.s32.totalorder %s20, 0
      %p68 = por %p66, %p67
      %s70 = sadd.s32 %s69, 1
      %p73 = scmp.eq.s32.totalorder %s14, 1
      %p74 = scmp.ne.s32.totalorder %s69, %s71
      %p75 = scmp.eq.s32.totalorder %s14, 0
      %p76 = por %p74, %p75
      %p77 = scmp.ne.s32.totalorder %s69, %s71
      %p78 = scmp.eq.s32.totalorder %s19, 1
      %p79 = por %p77, %p78
      %p80 = scmp.ne.s32.totalorder %s71, %s72
      %p81 = scmp.eq.s32.totalorder %s19, 0
      %p82 = por %p80, %p81
      %p83 = scmp.ne.s32.totalorder %s71, %s72
      %p84 = scmp.eq.s32.totalorder %s20, 1
      %p85 = por %p83, %p84
      %p87 = scmp.ne.s32.totalorder %s72, %s86
      %p88 = scmp.eq.s32.totalorder %s20, 0
      %p89 = por %p87, %p88
      %s91 = sadd.s32 %s90, 1
      %p94 = scmp.eq.s32.totalorder %s14, 1
      %p95 = scmp.ne.s32.totalorder %s90, %s92
      %p96 = scmp.eq.s32.totalorder %s14, 0
      %p97 = por %p95, %p96
      %p98 = scmp.ne.s32.totalorder %s90, %s92
      %p99 = scmp.eq.s32.totalorder %s19, 1
      %p100 = por %p98, %p99
      %p101 = scmp.ne.s32.totalorder %s92, %s93
      %p102 = scmp.eq.s32.totalorder %s19, 0
      %p103 = por %p101, %p102
      %p104 = scmp.ne.s32.totalorder %s92, %s93
      %p105 = scmp.eq.s32.totalorder %s20, 1
      %p106 = por %p104, %p105
      %p108 = scmp.ne.s32.totalorder %s93, %s107
      %p109 = scmp.eq.s32.totalorder %s20, 0
      %p110 = por %p108, %p109
      %s112 = sadd.s32 %s111, 1
      %p115 = scmp.eq.s32.totalorder %s14, 1
      %p116 = scmp.ne.s32.totalorder %s111, %s113
      %p117 = scmp.eq.s32.totalorder %s14, 0
      %p118 = por %p116, %p117
      %p119 = scmp.ne.s32.totalorder %s111, %s113
      %p120 = scmp.eq.s32.totalorder %s19, 1
      %p121 = por %p119, %p120
      %p122 = scmp.ne.s32.totalorder %s113, %s114
      %p123 = scmp.eq.s32.totalorder %s19, 0
      %p124 = por %p122, %p123
      %p125 = scmp.ne.s32.totalorder %s113, %s114
      %p126 = scmp.eq.s32.totalorder %s20, 1
      %p127 = por %p125, %p126
      %p129 = scmp.ne.s32.totalorder %s114, %s128
      %p130 = scmp.eq.s32.totalorder %s20, 0
      %p131 = por %p129, %p130
      %s132 = ssub.s32 %s14, %s21
      %p133 = scmp.eq.s32.totalorder %s132, 0
      %s135 = sadd.s32 %s134, 1
      %s136 = scalar_select %p133, %s134, %s135
      %p139 = pneg %p133
      %p140 = scmp.eq.s32.totalorder %s14, 1
      %p141 = por %p139, %p140
      %p142 = scmp.ne.s32.totalorder %s134, %s137
      %p143 = scmp.eq.s32.totalorder %s14, 0
      %p144 = por %p142, %p143
      %p145 = scmp.ne.s32.totalorder %s134, %s137
      %p146 = scmp.eq.s32.totalorder %s19, 1
      %p147 = por %p145, %p146
      %p148 = scmp.ne.s32.totalorder %s137, %s138
      %p149 = scmp.eq.s32.totalorder %s19, 0
      %p150 = por %p148, %p149
      %p151 = scmp.ne.s32.totalorder %s137, %s138
      %p152 = scmp.eq.s32.totalorder %s20, 1
      %p153 = por %p151, %p152
      %p155 = scmp.ne.s32.totalorder %s138, %s154
      %p156 = scmp.eq.s32.totalorder %s20, 0
      %p157 = por %p155, %p156
      %p158 = scmp.le.s32.totalorder 1, %s14
      %p159 = scmp.lt.s32.totalorder %s14, 3
      %p160 = pnand %p158, %p159
      %p161 = pneg %p160
      // Predicated region
      $region9: #{final_block_forward.1} parent=5 // pred_check
        _
      $region10: #{final_block_forward.1} parent=5 // pred_check_branch
        %163 = sbr.rel (%p160) target = $region12
      $region11: #{final_block_forward.1} parent=5 // pred_region
        %s164 = ssub.s32 %s14, 1
        // Predicated region
        $region13: #{final_block_forward.1} parent=11 // pred_check
          %p165 = pneg %p61
        $region14: #{final_block_forward.1} parent=11 // pred_check_branch
          %167 = sbr.rel (%p165) target = $region16
        $region15: #{final_block_forward.1} parent=11 // pred_region
          _
        $region16: #{final_block_forward.1} parent=11 // pred_fallthru
          _
        // Predicated region
        $region17: #{final_block_forward.1} parent=11 // pred_check
          %p168 = pneg %p82
        $region18: #{final_block_forward.1} parent=11 // pred_check_branch
          %170 = sbr.rel (%p168) target = $region20
        $region19: #{final_block_forward.1} parent=11 // pred_region
          _
        $region20: #{final_block_forward.1} parent=11 // pred_fallthru
          _
        // Predicated region
        $region21: #{final_block_forward.1} parent=11 // pred_check
          %p171 = pneg %p103
        $region22: #{final_block_forward.1} parent=11 // pred_check_branch
          %173 = sbr.rel (%p171) target = $region24
        $region23: #{final_block_forward.1} parent=11 // pred_region
          _
        $region24: #{final_block_forward.1} parent=11 // pred_fallthru
          _
        // Predicated region
        $region25: #{final_block_forward.1} parent=11 // pred_check
          %p174 = pneg %p124
        $region26: #{final_block_forward.1} parent=11 // pred_check_branch
          %176 = sbr.rel (%p174) target = $region28
        $region27: #{final_block_forward.1} parent=11 // pred_region
          _
        $region28: #{final_block_forward.1} parent=11 // pred_fallthru
          _
      $region12: #{final_block_forward.1} parent=5 // pred_fallthru
        _
      %p177 = scmp.lt.s32.totalorder %s14, 2
      // Predicated region
      $region29: #{final_block_forward.1} parent=5 // pred_check
        %p178 = pneg %p177
      $region30: #{final_block_forward.1} parent=5 // pred_check_branch
        %180 = sbr.rel (%p178) target = $region32
      $region31: #{final_block_forward.1} parent=5 // pred_region
        // Predicated region
        $region33: #{final_block_forward.1} parent=31 // pred_check
          %p181 = pneg %p34
        $region34: #{final_block_forward.1} parent=31 // pred_check_branch
          %183 = sbr.rel (%p181) target = $region36
        $region35: #{final_block_forward.1} parent=31 // pred_region
          %p184 = scmp.lt.s32.totalorder %s14, 1
          %s185 = scalar_select %p184, %s14, 1
          %s186 = smul.addr %s185, 8
          %s187 = smul.addr %s186, 8
          %s188 = scalar_lea.vmem %s0, %s187
        $region36: #{final_block_forward.1} parent=31 // pred_fallthru
          _
      $region32: #{final_block_forward.1} parent=5 // pred_fallthru
        _
      %p189 = scmp.le.s32.totalorder 1, %s14
      %p190 = scmp.lt.s32.totalorder %s14, 3
      %p191 = pnand %p189, %p190
      %p192 = pneg %p191
      // Predicated region
      $region37: #{final_block_forward.1} parent=5 // pred_check
        _
      $region38: #{final_block_forward.1} parent=5 // pred_check_branch
        %194 = sbr.rel (%p191) target = $region40
      $region39: #{final_block_forward.1} parent=5 // pred_region
        %s195 = ssub.s32 %s14, 1
        %p196 = scmp.lt.s32.totalorder %s19, 1
        %s197 = scalar_select %p196, %s19, 1
        %s198 = smul.addr %s197, 8
        %s199 = smul.addr %s198, 8
        %s200 = scalar_lea.vmem %s0, %s199
        %p201 = pneg %p40
        %p202 = pneg %p37
        %p203 = pneg %p61
        %p204 = pneg %p58
        %p205 = pneg %p82
        %p206 = pneg %p79
        %p207 = pneg %p103
        %p208 = pneg %p100
        %p209 = pneg %p124
        %p210 = pneg %p121
        %p211 = pneg %p150
        %p212 = pneg %p147
        %s213 = sand.u32 %s137, 1
        %s214 = scalar_lea.sflag [#allocation3], %s213
        %s215 = sand.u32 %s137, 1
        %s216 = scalar_lea.vmem [#allocation2], %s215
        %p217 = scmp.lt.s32.totalorder %s19, 1
        %s218 = scalar_select %p217, %s19, 1
        %s219 = smul.addr %s218, 8
        %s220 = smul.addr %s219, 8
        %s221 = scalar_lea.vmem %s0, %s220
        %v222 = vld [vmem:[%s221] sm:$0xff]
        %v223 = vld [vmem:[%s221 + $0x8] sm:$0xff]
        %v224 = vld [vmem:[%s221 + $0x10] sm:$0xff]
        %v225 = vld [vmem:[%s221 + $0x18] sm:$0xff]
        %v226 = vld [vmem:[%s221 + $0x20] sm:$0xff]
        %v227 = vld [vmem:[%s221 + $0x28] sm:$0xff]
        %v228 = vld [vmem:[%s221 + $0x30] sm:$0xff]
        %v229 = vld [vmem:[%s221 + $0x38] sm:$0xff]
        %v230 = vld [vmem:[%s1] sm:$0xff]
        %v231 = vld [vmem:[%s1 + $0x8] sm:$0xff]
        %v232 = vld [vmem:[%s1 + $0x10] sm:$0xff]
        %v233 = vld [vmem:[%s1 + $0x18] sm:$0xff]
        %v234 = vld [vmem:[%s1 + $0x20] sm:$0xff]
        %v235 = vld [vmem:[%s1 + $0x28] sm:$0xff]
        %v236 = vld [vmem:[%s1 + $0x30] sm:$0xff]
        %v237 = vld [vmem:[%s1 + $0x38] sm:$0xff]
        %v238 = vld [vmem:[%s1 + $0x40] sm:$0xff]
        %v239 = vld [vmem:[%s1 + $0x48] sm:$0xff]
        %v240 = vld [vmem:[%s1 + $0x50] sm:$0xff]
        %v241 = vld [vmem:[%s1 + $0x58] sm:$0xff]
        %v242 = vld [vmem:[%s1 + $0x60] sm:$0xff]
        %v243 = vld [vmem:[%s1 + $0x68] sm:$0xff]
        %v244 = vld [vmem:[%s1 + $0x70] sm:$0xff]
        %v245 = vld [vmem:[%s1 + $0x78] sm:$0xff]
        %v246 = vld [vmem:[%s2] sm:$0x1]
        %v248 = vlaneseq
        %v249 = vshrl.u32 %v248, 7
        %v250 = vsub.s32 0, %v249
        %v251 = vrot.slane %v246, %v250
        %253 = vmatprep.subr.mxu0 0.0
        %254 = vmatpush1.msra.mxu0 %v230
        %255 = vmatprep.subr.mxu0 0.0
        %256 = vmatpush1.msra.mxu0 %v231
        %257 = vmatprep.subr.mxu0 0.0
        %258 = vmatpush1.msra.mxu0 %v232
        %259 = vmatprep.subr.mxu0 0.0
        %260 = vmatpush1.msra.mxu0 %v233
        %261 = vmatprep.subr.mxu0 0.0
        %262 = vmatpush1.msra.mxu0 %v234
        %263 = vmatprep.subr.mxu0 0.0
        %264 = vmatpush1.msra.mxu0 %v235
        %265 = vmatprep.subr.mxu0 0.0
        %266 = vmatpush1.msra.mxu0 %v236
        %267 = vmatprep.subr.mxu0 0.0
        %268 = vmatpush1.msra.mxu0 %v237
        %269 = vmatprep.subr.mxu0 0.0
        %270 = vmatpush1.msra.mxu0 %v238
        %271 = vmatprep.subr.mxu0 0.0
        %272 = vmatpush1.msra.mxu0 %v239
        %273 = vmatprep.subr.mxu0 0.0
        %274 = vmatpush1.msra.mxu0 %v240
        %275 = vmatprep.subr.mxu0 0.0
        %276 = vmatpush1.msra.mxu0 %v241
        %277 = vmatprep.subr.mxu0 0.0
        %278 = vmatpush1.msra.mxu0 %v242
        %279 = vmatprep.subr.mxu0 0.0
        %280 = vmatpush1.msra.mxu0 %v243
        %281 = vmatprep.subr.mxu0 0.0
        %282 = vmatpush1.msra.mxu0 %v244
        %283 = vmatprep.subr.mxu0 0.0
        %284 = vmatpush1.msra.mxu0 %v245
        %285 = vmatprep.subr.mxu0 0.0
        %286 = vmatpush1.msra.mxu0 0.0
        %287 = vmatprep.subr.mxu0 0.0
        %288 = vmatpush1.msra.mxu0 0.0
        %289 = vmatprep.subr.mxu0 0.0
        %290 = vmatpush1.msra.mxu0 0.0
        %291 = vmatprep.subr.mxu0 0.0
        %292 = vmatpush1.msra.mxu0 0.0
        %293 = vmatprep.subr.mxu0 0.0
        %294 = vmatpush1.msra.mxu0 0.0
        %295 = vmatprep.subr.mxu0 0.0
        %296 = vmatpush1.msra.mxu0 0.0
        %297 = vmatprep.subr.mxu0 0.0
        %298 = vmatpush1.msra.mxu0 0.0
        %299 = vmatprep.subr.mxu0 0.0
        %300 = vmatpush1.msra.mxu0 0.0
        %301 = vmatprep.subr.mxu0 0.0
        %302 = vmatpush1.msra.mxu0 0.0
        %303 = vmatprep.subr.mxu0 0.0
        %304 = vmatpush1.msra.mxu0 0.0
        %305 = vmatprep.subr.mxu0 0.0
        %306 = vmatpush1.msra.mxu0 0.0
        %307 = vmatprep.subr.mxu0 0.0
        %308 = vmatpush1.msra.mxu0 0.0
        %309 = vmatprep.subr.mxu0 0.0
        %310 = vmatpush1.msra.mxu0 0.0
        %311 = vmatprep.subr.mxu0 0.0
        %312 = vmatpush1.msra.mxu0 0.0
        %313 = vmatprep.subr.mxu0 0.0
        %314 = vmatpush1.msra.mxu0 0.0
        %315 = vmatprep.subr.mxu0 0.0
        %316 = vmatpush1.msra.mxu0 0.0
        %317 = vmatprep.mubr.f32.mxu0 0.0
        %318 = vmatmul.mubr.f32.gmra.mrb[0].mxu0 %v222
        %v319 = vpop.f32.mrb[0].mxu0
        %v320 = vadd.f32 %v251, %v319
        %v321 = vpop.f32.mrb[0].mxu0
        %322 = vmatprep.mubr.f32.mxu0 0.0
        %323 = vmatmul.mubr.f32.gmra.mrb[0].mxu0 %v223
        %v324 = vpop.f32.mrb[0].mxu0
        %v325 = vadd.f32 %v251, %v324
        %v326 = vpop.f32.mrb[0].mxu0
        %327 = vmatprep.mubr.f32.mxu0 0.0
        %328 = vmatmul.mubr.f32.gmra.mrb[0].mxu0 %v224
        %v329 = vpop.f32.mrb[0].mxu0
        %v330 = vadd.f32 %v251, %v329
        %v331 = vpop.f32.mrb[0].mxu0
        %332 = vmatprep.mubr.f32.mxu0 0.0
        %333 = vmatmul.mubr.f32.gmra.mrb[0].mxu0 %v225
        %v334 = vpop.f32.mrb[0].mxu0
        %v335 = vadd.f32 %v251, %v334
        %v336 = vpop.f32.mrb[0].mxu0
        %337 = vmatprep.mubr.f32.mxu0 0.0
        %338 = vmatmul.mubr.f32.gmra.mrb[0].mxu0 %v226
        %v339 = vpop.f32.mrb[0].mxu0
        %v340 = vadd.f32 %v251, %v339
        %v341 = vpop.f32.mrb[0].mxu0
        %342 = vmatprep.mubr.f32.mxu0 0.0
        %343 = vmatmul.mubr.f32.gmra.mrb[0].mxu0 %v227
        %v344 = vpop.f32.mrb[0].mxu0
        %v345 = vadd.f32 %v251, %v344
        %v346 = vpop.f32.mrb[0].mxu0
        %347 = vmatprep.mubr.f32.mxu0 0.0
        %348 = vmatmul.mubr.f32.gmra.mrb[0].mxu0 %v228
        %v349 = vpop.f32.mrb[0].mxu0
        %v350 = vadd.f32 %v251, %v349
        %v351 = vpop.f32.mrb[0].mxu0
        %352 = vmatprep.mubr.f32.mxu0 0.0
        %353 = vmatmul.mubr.f32.gmra.mrb[0].mxu0 %v229
        %v354 = vpop.f32.mrb[0].mxu0
        %v355 = vadd.f32 %v251, %v354
        %v356 = vpop.f32.mrb[0].mxu0
        %357 = vdwg.mxu0
        %v358 = vmax.f32 %v320, 0.0
        %v359 = vmax.f32 %v325, 0.0
        %v360 = vmax.f32 %v330, 0.0
        %v361 = vmax.f32 %v335, 0.0
        %v362 = vmax.f32 %v340, 0.0
        %v363 = vmax.f32 %v345, 0.0
        %v364 = vmax.f32 %v350, 0.0
        %v365 = vmax.f32 %v355, 0.0
        %v366 = vadd.f32 %v358, %v359
        %v367 = vadd.f32 %v366, %v360
        %v368 = vadd.f32 %v367, %v361
        %v369 = vadd.f32 %v368, %v362
        %v370 = vadd.f32 %v369, %v363
        %v371 = vadd.f32 %v370, %v364
        %v372 = vadd.f32 %v371, %v365
        %v373 = vrot.slane %v372, 4
        %v374 = vadd.f32 %v372, %v373
        %v375 = vrot.slane %v374, 2
        %v376 = vadd.f32 %v374, %v375
        %v377 = vrot.slane %v376, 1
        %v378 = vadd.f32 %v376, %v377
        %v379 = vld [vmem:[%s3] sm:$0xff]
        %v380 = vld [vmem:[%s3 + $0x8] sm:$0xff]
        %v381 = vld [vmem:[%s3 + $0x10] sm:$0xff]
        %v382 = vld [vmem:[%s3 + $0x18] sm:$0xff]
        %v383 = vld [vmem:[%s3 + $0x20] sm:$0xff]
        %v384 = vld [vmem:[%s3 + $0x28] sm:$0xff]
        %v385 = vld [vmem:[%s3 + $0x30] sm:$0xff]
        %v386 = vld [vmem:[%s3 + $0x38] sm:$0xff]
        %v387 = vld [vmem:[%s3 + $0x40] sm:$0xff]
        %v388 = vld [vmem:[%s3 + $0x48] sm:$0xff]
        %v389 = vld [vmem:[%s3 + $0x50] sm:$0xff]
        %v390 = vld [vmem:[%s3 + $0x58] sm:$0xff]
        %v391 = vld [vmem:[%s3 + $0x60] sm:$0xff]
        %v392 = vld [vmem:[%s3 + $0x68] sm:$0xff]
        %v393 = vld [vmem:[%s3 + $0x70] sm:$0xff]
        %v394 = vld [vmem:[%s3 + $0x78] sm:$0xff]
        %v395 = vld [vmem:[%s4] sm:$0x1]
        %396 = vmatprep.subr.mxu0 0.0
        %397 = vmatpush1.msra.mxu0 %v379
        %398 = vmatprep.subr.mxu0 0.0
        %399 = vmatpush1.msra.mxu0 %v380
        %400 = vmatprep.subr.mxu0 0.0
        %401 = vmatpush1.msra.mxu0 %v381
        %402 = vmatprep.subr.mxu0 0.0
        %403 = vmatpush1.msra.mxu0 %v382
        %404 = vmatprep.subr.mxu0 0.0
        %405 = vmatpush1.msra.mxu0 %v383
        %406 = vmatprep.subr.mxu0 0.0
        %407 = vmatpush1.msra.mxu0 %v384
        %408 = vmatprep.subr.mxu0 0.0
        %409 = vmatpush1.msra.mxu0 %v385
        %410 = vmatprep.subr.mxu0 0.0
        %411 = vmatpush1.msra.mxu0 %v386
        %412 = vmatprep.subr.mxu0 0.0
        %413 = vmatpush1.msra.mxu0 %v387
        %414 = vmatprep.subr.mxu0 0.0
        %415 = vmatpush1.msra.mxu0 %v388
        %416 = vmatprep.subr.mxu0 0.0
        %417 = vmatpush1.msra.mxu0 %v389
        %418 = vmatprep.subr.mxu0 0.0
        %419 = vmatpush1.msra.mxu0 %v390
        %420 = vmatprep.subr.mxu0 0.0
        %421 = vmatpush1.msra.mxu0 %v391
        %422 = vmatprep.subr.mxu0 0.0
        %423 = vmatpush1.msra.mxu0 %v392
        %424 = vmatprep.subr.mxu0 0.0
        %425 = vmatpush1.msra.mxu0 %v393
        %426 = vmatprep.subr.mxu0 0.0
        %427 = vmatpush1.msra.mxu0 %v394
        %428 = vmatprep.subr.mxu0 0.0
        %429 = vmatpush1.msra.mxu0 0.0
        %430 = vmatprep.subr.mxu0 0.0
        %431 = vmatpush1.msra.mxu0 0.0
        %432 = vmatprep.subr.mxu0 0.0
        %433 = vmatpush1.msra.mxu0 0.0
        %434 = vmatprep.subr.mxu0 0.0
        %435 = vmatpush1.msra.mxu0 0.0
        %436 = vmatprep.subr.mxu0 0.0
        %437 = vmatpush1.msra.mxu0 0.0
        %438 = vmatprep.subr.mxu0 0.0
        %439 = vmatpush1.msra.mxu0 0.0
        %440 = vmatprep.subr.mxu0 0.0
        %441 = vmatpush1.msra.mxu0 0.0
        %442 = vmatprep.subr.mxu0 0.0
        %443 = vmatpush1.msra.mxu0 0.0
        %444 = vmatprep.subr.mxu0 0.0
        %445 = vmatpush1.msra.mxu0 0.0
        %446 = vmatprep.subr.mxu0 0.0
        %447 = vmatpush1.msra.mxu0 0.0
        %448 = vmatprep.subr.mxu0 0.0
        %449 = vmatpush1.msra.mxu0 0.0
        %450 = vmatprep.subr.mxu0 0.0
        %451 = vmatpush1.msra.mxu0 0.0
        %452 = vmatprep.subr.mxu0 0.0
        %453 = vmatpush1.msra.mxu0 0.0
        %454 = vmatprep.subr.mxu0 0.0
        %455 = vmatpush1.msra.mxu0 0.0
        %456 = vmatprep.subr.mxu0 0.0
        %457 = vmatpush1.msra.mxu0 0.0
        %458 = vmatprep.subr.mxu0 0.0
        %459 = vmatpush1.msra.mxu0 0.0
        %460 = vmatprep.mubr.f32.mxu0 0.0
        %461 = vmatmul.mubr.f32.gmra.mrb[0].mxu0 %v378
        %v462 = vpop.f32.mrb[0].mxu0
        %v463 = vadd.f32 %v395, %v462
        %v464 = vpop.f32.mrb[0].mxu0
        %465 = vdwg.mxu0
        %vm466 = vcmask 1040384
        %v467 = vsel %vm466, %v463, -inf
        %468 = vmax.xlane.f32.xlu0 %v467
        %v469 = vpop.xlane.xlu0 %468
        %v470 = vsub.f32 %v463, %v469
        %v471 = vmul.f32 %v470, 1.442695
        %v472 = vpow.pop %v471
        %v473 = vsel %vm466, %v472, 0.0
        %474 = vadd.xlane.f32.xlu0 %v473
        %v475 = vpop.xlane.xlu0 %474
        %v476 = vlog2.pop %v475
        %v477 = vmul.f32 %v476, 0.6931472
        %v478 = vadd.f32 %v477, %v469
        %v479 = vsub.f32 %v463, %v478
        %480 = vst [vmem:[%s216] sm:$0x1] %v479
        %s481 = sand.u32 %s137, 1
        %s482 = scalar_lea.sflag [#allocation3], %s481
        %s483 = sand.u32 %s137, 1
        %s484 = scalar_lea.vmem [#allocation2], %s483
        // Predicated region
        $region41: #{final_block_forward.1} parent=39 // pred_check
          %p485 = pneg %p147
        $region42: #{final_block_forward.1} parent=39 // pred_check_branch
          %487 = sbr.rel (%p485) target = $region44
        $region43: #{final_block_forward.1} parent=39 // pred_region
          %s489 = ssub.s32 16, 16
          %490 = vsyncadd %s482, %s489
          %s491 = smul.addr %s19, 16
          %s492 = scalar_lea.hbm %s5, %s491
          %s494 = sshll.u32 %s484, 4
          %s495 = int_to_ptr.vmem [resolvable:$true] %s494
          %497 = dma.vmem_to_hbm [thread:$0]  %s495, 16, %s492, %s482
        $region44: #{final_block_forward.1} parent=39 // pred_fallthru
          _
      $region40: #{final_block_forward.1} parent=5 // pred_fallthru
        _
      %p498 = scmp.le.s32.totalorder 2, %s14
      // Predicated region
      $region45: #{final_block_forward.1} parent=5 // pred_check
        %p499 = pneg %p498
      $region46: #{final_block_forward.1} parent=5 // pred_check_branch
        %501 = sbr.rel (%p499) target = $region48
      $region47: #{final_block_forward.1} parent=5 // pred_region
        %s502 = ssub.s32 %s14, 2
        // Predicated region
        $region49: #{final_block_forward.1} parent=47 // pred_check
          %p503 = pneg %p153
        $region50: #{final_block_forward.1} parent=47 // pred_check_branch
          %505 = sbr.rel (%p503) target = $region52
        $region51: #{final_block_forward.1} parent=47 // pred_region
          %s506 = sand.u32 %s138, 1
          %s507 = scalar_lea.sflag [#allocation3], %s506
          %s508 = sand.u32 %s138, 1
          %s509 = scalar_lea.vmem [#allocation2], %s508
          %510 = dma.done %s507, 16
        $region52: #{final_block_forward.1} parent=47 // pred_fallthru
          _
      $region48: #{final_block_forward.1} parent=5 // pred_fallthru
        _
    $region6: #{final_block_forward.1} parent=1 // loop_footer
      %s18 = sadd.s32 1, %s14
    $region7: #{final_block_forward.1} parent=1 // loop_footer_branch
      %13 = sbr.rel target = $region3
    $region8: #{final_block_forward.1} parent=1 // loop_exit
      _
    %511 = vsyncpa [#allocation3], 1
    %s512 = scalar_lea.sflag [#allocation3], 1
    %513 = vsyncpa %s512, 1

</llo_original>
